<compile_context>
chip_gen: v5e
topology: v5e:2x2
jax: 0.10.0
libtpu: 0.0.40
codegen_flags: <defaults>
</compile_context>

<pallas_src>
import jax
import jax.numpy as jnp
from jax.experimental import pallas as pl
from jax.experimental.pallas import tpu as pltpu

HID = 32      # hidden_size
VOCAB = 64    # output_size
SEQ = 8       # encoder max_len
NLAYERS = 1

LANES = 128
OUT_ROWS = 8
assert SEQ == OUT_ROWS and VOCAB + HID + 1 <= LANES and 3 * HID <= LANES and VOCAB <= LANES

# --- packed parameter slab layout: every block sits at lane offset 0; matrix blocks
#     start at row offsets that are multiples of 8 so row-slices are tile-aligned ---
EMB_ROW  = 0                          # (VOCAB, HID)    embedding table
OW_ROW   = EMB_ROW + VOCAB            # (2H, VOCAB)     out W: rows [0:H]=gru-out half, [H:2H]=context half
GWI_ROW  = OW_ROW + 2 * HID           # (2H, 3H)        GRU W_ih on [emb;ctx], gate cols r|z|n
GWH_ROW  = GWI_ROW + 2 * HID          # (H, 3H)         GRU W_hh, gate cols r|z|n
WATT_ROW = GWH_ROW + HID              # (2H, 1)         folded attention vector  aW @ av  (column)
BATT_ROW = WATT_ROW + 2 * HID         # (1, 1)          folded attention bias    ab @ av
GBI_ROW  = BATT_ROW + 1               # (1, 3H)         GRU b_ih
GBH_ROW  = GBI_ROW + 1                # (1, 3H)         GRU b_hh
OB_ROW   = GBH_ROW + 1                # (1, VOCAB)      out bias
SLAB_ROWS = ((OB_ROW + 1 + 7) // 8) * 8

# --- packed state slab (one lane-dense (16,128) input instead of separate h0/enc DMAs) ---
STATE_ROWS = 16
STATE_H_ROW = 8                       # row 8, lanes [0:H)   : last_hidden[-1]
# rows [0:SEQ), lanes [0:H)          : encoder_outputs (seq-major, batch squeezed)

# --- packed output slab layout: one lane-dense (8, 128) buffer ---
LOGP_COL = 0                          # row 0, lanes [0:VOCAB)          : log-softmax output
HNEW_COL = VOCAB                      # row 0, lanes [VOCAB:VOCAB+HID)  : new hidden state
ATTN_COL = VOCAB + HID                # rows [0:SEQ), single lane       : attention weights


def _decoder_kernel(word_ref, slab_ref, state_ref, out_ref):
    f32 = jnp.float32
    H, H2, H3, V = HID, 2 * HID, 3 * HID, VOCAB

    # --- unpack state: encoder outputs (S,H) and last hidden (1,H) ---
    enc = state_ref[0:SEQ, 0:H]                                        # (S, H)
    h_last = state_ref[STATE_H_ROW:STATE_H_ROW + 1, 0:H]               # (1, H) == last_hidden[-1]

    # --- embedding lookup: word_embedded = embedding(word_input).view(1, 1, -1) ---
    wid = jnp.clip(word_ref[0], 0, V - 1)       # clamp: VMEM reads are not bounds-checked
    emb = slab_ref[pl.ds(EMB_ROW + wid, 1), :][:, 0:H]                 # (1, H)

    # --- GRU work independent of the attention context (issued early, off critical path) ---
    gWh = slab_ref[GWH_ROW:GWH_ROW + H, 0:H3]                          # (H, 3H)
    gbh = slab_ref[GBH_ROW:GBH_ROW + 1, 0:H3]                          # (1, 3H)
    gh = jnp.dot(h_last, gWh, preferred_element_type=f32) + gbh        # (1, 3H)

    gbi = slab_ref[GBI_ROW:GBI_ROW + 1, 0:H3]                          # (1, 3H)
    gWi_emb = slab_ref[GWI_ROW:GWI_ROW + H, 0:H3]                      # (H, 3H)   rows for emb half
    gi_emb = jnp.dot(emb, gWi_emb, preferred_element_type=f32) + gbi   # (1, 3H)

    # --- concat attention with the score projection folded at pack time:
    #     energies_i = enc_i . w_att[H:2H] + (h_last . w_att[0:H] + b_att)
    #     (the second term is constant over i; kept for exact algebraic equivalence) ---
    w_att_h = slab_ref[WATT_ROW:WATT_ROW + H, 0:1]                     # (H, 1)
    w_att_e = slab_ref[WATT_ROW + H:WATT_ROW + H2, 0:1]                # (H, 1)
    b_att = slab_ref[BATT_ROW:BATT_ROW + 1, 0:1]                       # (1, 1)
    h_const = jnp.dot(h_last, w_att_h, preferred_element_type=f32) + b_att      # (1, 1)
    energies = jnp.dot(enc, w_att_e, preferred_element_type=f32) + h_const      # (S, 1)
    energies = energies - jnp.max(energies, axis=0, keepdims=True)
    wexp = jnp.exp(energies)
    denom = jnp.sum(wexp, axis=0, keepdims=True)                       # (1, 1)
    attn_w = wexp * pl.reciprocal(denom, approx=True)                  # (S, 1) softmax over seq (EUP)

    # --- context = attn_weights.bmm(encoder_outputs.transpose(0,1)) ---
    ctx = jnp.sum(attn_w * enc, axis=0, keepdims=True)                 # (1, H)

    # --- output layer, context half: issued as soon as ctx is ready so it overlaps
    #     the GRU sigmoid/tanh work ---
    oW_h = slab_ref[OW_ROW:OW_ROW + H, 0:V]                            # (H, V)
    oW_c = slab_ref[OW_ROW + H:OW_ROW + H2, 0:V]                       # (H, V)
    ob = slab_ref[OB_ROW:OB_ROW + 1, 0:V]                              # (1, V)
    ctx_logits = jnp.dot(ctx, oW_c, preferred_element_type=f32) + ob   # (1, V)

    # --- GRU cell on rnn_input = [word_embedded ; context], gate order r|z|n ---
    gWi_ctx = slab_ref[GWI_ROW + H:GWI_ROW + H2, 0:H3]                 # (H, 3H)  rows for ctx half
    gi = gi_emb + jnp.dot(ctx, gWi_ctx, preferred_element_type=f32)    # (1, 3H)
    r = jax.nn.sigmoid(gi[:, 0:H] + gh[:, 0:H])
    z = jax.nn.sigmoid(gi[:, H:H2] + gh[:, H:H2])
    n = jnp.tanh(gi[:, H2:H3] + r * gh[:, H2:H3])
    h_new = (1.0 - z) * n + z * h_last                                 # (1, H)

    # --- output = log_softmax(out([gru_output ; context]), dim=1), split matmul ---
    logits = ctx_logits + jnp.dot(h_new, oW_h, preferred_element_type=f32)      # (1, V)
    m = jnp.max(logits, axis=-1, keepdims=True)
    lse = m + jnp.log(jnp.sum(jnp.exp(logits - m), axis=-1, keepdims=True))
    logp = logits - lse                                                # (1, V)

    # --- single lane-dense packed output, assembled in vregs, ONE unmasked 128-wide store:
    #     row 0 = [logp(64) | h_new(32) | pad], lane ATTN_COL rows [0:SEQ) = attn weights ---
    pad = jnp.zeros((1, LANES - V - H), f32)
    row0 = jnp.concatenate([logp, h_new, pad], axis=-1)                # (1, 128)
    lane = jax.lax.broadcasted_iota(jnp.int32, (OUT_ROWS, LANES), 1)
    row = jax.lax.broadcasted_iota(jnp.int32, (OUT_ROWS, LANES), 0)
    full = jnp.where(row == 0, jnp.broadcast_to(row0, (OUT_ROWS, LANES)), 0.0)
    full = jnp.where((lane == ATTN_COL) & (row < SEQ),
                     jnp.broadcast_to(attn_w, (OUT_ROWS, LANES)), full)
    out_ref[...] = full


def init_params(key):
    ks = jax.random.split(key, 10)
    s = 0.1
    # Weight matrices are stored input-major (in_features, out_features), gates fused.
    return dict(
        emb=jax.random.normal(ks[0], (VOCAB, HID), jnp.float32) * s,
        aW=jax.random.normal(ks[1], (2 * HID, HID), jnp.float32) * s,   # [hidden half ; encoder half]
        ab=jax.random.normal(ks[2], (1, HID), jnp.float32) * s,
        av=jax.random.normal(ks[3], (HID, 1), jnp.float32) * s,         # column vector
        gWi=jax.random.normal(ks[4], (2 * HID, 3 * HID), jnp.float32) * s,  # rows [emb;ctx], cols r|z|n
        gWh=jax.random.normal(ks[5], (HID, 3 * HID), jnp.float32) * s,      # cols r|z|n
        gbi=jax.random.normal(ks[6], (1, 3 * HID), jnp.float32) * s,
        gbh=jax.random.normal(ks[7], (1, 3 * HID), jnp.float32) * s,
        oW=jax.random.normal(ks[8], (2 * HID, VOCAB), jnp.float32) * s,     # [gru-out half ; context half]
        ob=jax.random.normal(ks[9], (1, VOCAB), jnp.float32) * s,
    )


def pack_params(p):
    """Pack all weights/biases into one lane-dense f32 (SLAB_ROWS, 128) slab (done once).

    The attention score projection is folded here: w_att = aW @ av, b_att = ab @ av.
    """
    slab = jnp.zeros((SLAB_ROWS, LANES), jnp.float32)
    slab = slab.at[EMB_ROW:EMB_ROW + VOCAB, 0:HID].set(p["emb"])
    slab = slab.at[OW_ROW:OW_ROW + 2 * HID, 0:VOCAB].set(p["oW"])
    slab = slab.at[GWI_ROW:GWI_ROW + 2 * HID, 0:3 * HID].set(p["gWi"])
    slab = slab.at[GWH_ROW:GWH_ROW + HID, 0:3 * HID].set(p["gWh"])
    w_att = p["aW"] @ p["av"]                                  # (2H, 1)
    b_att = p["ab"] @ p["av"]                                  # (1, 1)
    slab = slab.at[WATT_ROW:WATT_ROW + 2 * HID, 0:1].set(w_att)
    slab = slab.at[BATT_ROW, 0].set(b_att[0, 0])
    slab = slab.at[GBI_ROW, 0:3 * HID].set(p["gbi"][0])
    slab = slab.at[GBH_ROW, 0:3 * HID].set(p["gbh"][0])
    slab = slab.at[OB_ROW, 0:VOCAB].set(p["ob"][0])
    return slab


def _pack_state(last_hidden, encoder_outputs):
    """Pack last_hidden[-1] and encoder_outputs into one lane-dense (16,128) state slab."""
    h = jnp.reshape(last_hidden, (NLAYERS, HID))[NLAYERS - 1]
    enc = jnp.reshape(encoder_outputs, (SEQ, HID))
    state = jnp.zeros((STATE_ROWS, LANES), jnp.float32)
    state = state.at[0:SEQ, 0:HID].set(enc)
    state = state.at[STATE_H_ROW, 0:HID].set(h)
    return state


@jax.jit
def bahdanau_decoder_step(word_input, last_hidden, encoder_outputs, param_slab):
    # word_input: int32 scalar; last_hidden: (NLAYERS, 1, H); encoder_outputs: (S, 1, H)
    word = jnp.reshape(word_input.astype(jnp.int32), (1,))
    state = _pack_state(last_hidden, encoder_outputs)

    vmem = pl.BlockSpec(memory_space=pltpu.MemorySpace.VMEM)
    smem = pl.BlockSpec(memory_space=pltpu.MemorySpace.SMEM)

    out_slab = pl.pallas_call(
        _decoder_kernel,
        out_shape=jax.ShapeDtypeStruct((OUT_ROWS, LANES), jnp.float32),
        in_specs=[smem, vmem, vmem],
        out_specs=vmem,
    )(word, param_slab, state)

    output = out_slab[0:1, LOGP_COL:LOGP_COL + VOCAB]                 # (1, output_size)
    hidden = out_slab[0, HNEW_COL:HNEW_COL + HID].reshape(NLAYERS, 1, HID)
    attn_weights = out_slab[0:SEQ, ATTN_COL].reshape(1, 1, SEQ)       # (B, 1, max_len)
    return output, hidden, attn_weights


def reference(word_input, last_hidden, encoder_outputs, p):
    """Pure-JAX reference of the same math (unfolded weights), for a correctness check."""
    emb = p["emb"][word_input]                       # (H,)
    h = last_hidden[-1, 0]                           # (H,)
    enc = encoder_outputs[:, 0]                      # (S, H)
    attn_in = jnp.concatenate([jnp.broadcast_to(h, (SEQ, HID)), enc], axis=-1)
    e = attn_in @ p["aW"] + p["ab"][0]               # (S, H)
    w = jax.nn.softmax((e @ p["av"])[:, 0])          # (S,)
    ctx = w @ enc                                    # (H,)
    rnn_in = jnp.concatenate([emb, ctx])             # (2H,)
    gi = rnn_in @ p["gWi"] + p["gbi"][0]
    gh = h @ p["gWh"] + p["gbh"][0]
    r = jax.nn.sigmoid(gi[0:HID] + gh[0:HID])
    z = jax.nn.sigmoid(gi[HID:2 * HID] + gh[HID:2 * HID])
    n = jnp.tanh(gi[2 * HID:] + r * gh[2 * HID:])
    h_new = (1.0 - z) * n + z * h
    logits = jnp.concatenate([h_new, ctx]) @ p["oW"] + p["ob"][0]
    logp = jax.nn.log_softmax(logits)
    return (logp[None, :], h_new.reshape(NLAYERS, 1, HID), w.reshape(1, 1, SEQ))


if __name__ == "__main__":
    key = jax.random.PRNGKey(0)
    kp, kh, ke = jax.random.split(key, 3)
    params = init_params(kp)
    param_slab = pack_params(params)                 # packed once; reused every decode step

    word_input = jnp.array(5, dtype=jnp.int32)                        # single token, batch = 1
    last_hidden = jax.random.normal(kh, (NLAYERS, 1, HID), jnp.float32)
    encoder_outputs = jax.random.normal(ke, (SEQ, 1, HID), jnp.float32)

    out, hidden, attn_w = bahdanau_decoder_step(word_input, last_hidden, encoder_outputs, param_slab)
    jax.block_until_ready((out, hidden, attn_w))

    ref_out, ref_hid, ref_w = reference(word_input, last_hidden, encoder_outputs, params)
    assert out.shape == (1, VOCAB) and hidden.shape == (NLAYERS, 1, HID) and attn_w.shape == (1, 1, SEQ)
    # Tolerance covers the EUP approximate reciprocal used in the attention-softmax normalization
    # and the pack-time folding of the attention score projection.
    assert jnp.allclose(out, ref_out, atol=5e-3, rtol=5e-3)
    assert jnp.allclose(hidden, ref_hid, atol=5e-3, rtol=5e-3)
    assert jnp.allclose(attn_w, ref_w, atol=5e-3, rtol=5e-3)

    print("KERNEL_OK")
</pallas_src>

<mosaic_0001>
module attributes {stable_mosaic.version = 11 : i64} {
  func.func @_decoder_kernel(%arg0: memref<1xi32, #tpu.memory_space<smem>>, %arg1: memref<296x128xf32, #tpu.memory_space<vmem>>, %arg2: memref<16x128xf32, #tpu.memory_space<vmem>>, %arg3: memref<8x128xf32, #tpu.memory_space<vmem>>) attributes {dimension_semantics = [], scalar_prefetch = 0 : i64, scratch_operands = 0 : i64, tpu.core_type = #tpu.core_type<tc>} {
    %c0 = arith.constant 0 : index
    %c0_0 = arith.constant 0 : index
    %0 = vector.load %arg2[%c0, %c0_0] : memref<16x128xf32, #tpu.memory_space<vmem>>, vector<8x32xf32>
    %c8 = arith.constant 8 : index
    %c0_1 = arith.constant 0 : index
    %1 = vector.load %arg2[%c8, %c0_1] : memref<16x128xf32, #tpu.memory_space<vmem>>, vector<1x32xf32>
    %c0_2 = arith.constant 0 : index
    %2 = memref.load %arg0[%c0_2] : memref<1xi32, #tpu.memory_space<smem>>
    %c0_i32 = arith.constant 0 : i32
    %c63_i32 = arith.constant 63 : i32
    %3 = arith.maxsi %c0_i32, %2 : i32
    %4 = arith.minsi %c63_i32, %3 : i32
    %c0_i32_3 = arith.constant 0 : i32
    %5 = arith.addi %c0_i32_3, %4 : i32
    %6 = arith.index_cast %5 : i32 to index
    %c0_4 = arith.constant 0 : index
    %7 = vector.load %arg1[%6, %c0_4] : memref<296x128xf32, #tpu.memory_space<vmem>>, vector<1x128xf32>
    %8 = vector.extract_strided_slice %7 {offsets = [0, 0], sizes = [1, 32], strides = [1, 1]} : vector<1x128xf32> to vector<1x32xf32>
    %c192 = arith.constant 192 : index
    %c0_5 = arith.constant 0 : index
    %9 = vector.load %arg1[%c192, %c0_5] : memref<296x128xf32, #tpu.memory_space<vmem>>, vector<32x96xf32>
    %c290 = arith.constant 290 : index
    %c0_6 = arith.constant 0 : index
    %10 = vector.load %arg1[%c290, %c0_6] : memref<296x128xf32, #tpu.memory_space<vmem>>, vector<1x96xf32>
    %cst = arith.constant dense<0.000000e+00> : vector<1x96xf32>
    %11 = tpu.matmul %1, %9, %cst {dimension_numbers = #tpu.dot_dimension_numbers<[1], [0], [0], [1], [0, 0, 1, 1], [], []>} : vector<1x32xf32>, vector<32x96xf32>, vector<1x96xf32> -> vector<1x96xf32>
    %12 = arith.addf %11, %10 : vector<1x96xf32>
    %c289 = arith.constant 289 : index
    %c0_7 = arith.constant 0 : index
    %13 = vector.load %arg1[%c289, %c0_7] : memref<296x128xf32, #tpu.memory_space<vmem>>, vector<1x96xf32>
    %c128 = arith.constant 128 : index
    %c0_8 = arith.constant 0 : index
    %14 = vector.load %arg1[%c128, %c0_8] : memref<296x128xf32, #tpu.memory_space<vmem>>, vector<32x96xf32>
    %cst_9 = arith.constant dense<0.000000e+00> : vector<1x96xf32>
    %15 = tpu.matmul %8, %14, %cst_9 {dimension_numbers = #tpu.dot_dimension_numbers<[1], [0], [0], [1], [0, 0, 1, 1], [], []>} : vector<1x32xf32>, vector<32x96xf32>, vector<1x96xf32> -> vector<1x96xf32>
    %16 = arith.addf %15, %13 : vector<1x96xf32>
    %c224 = arith.constant 224 : index
    %c0_10 = arith.constant 0 : index
    %17 = vector.load %arg1[%c224, %c0_10] : memref<296x128xf32, #tpu.memory_space<vmem>>, vector<32x1xf32>
    %c256 = arith.constant 256 : index
    %c0_11 = arith.constant 0 : index
    %18 = vector.load %arg1[%c256, %c0_11] : memref<296x128xf32, #tpu.memory_space<vmem>>, vector<32x1xf32>
    %c288 = arith.constant 288 : index
    %c0_12 = arith.constant 0 : index
    %19 = vector.load %arg1[%c288, %c0_12] : memref<296x128xf32, #tpu.memory_space<vmem>>, vector<1x1xf32>
    %cst_13 = arith.constant dense<0.000000e+00> : vector<1x1xf32>
    %20 = tpu.matmul %1, %17, %cst_13 {dimension_numbers = #tpu.dot_dimension_numbers<[1], [0], [0], [1], [0, 0, 1, 1], [], []>} : vector<1x32xf32>, vector<32x1xf32>, vector<1x1xf32> -> vector<1x1xf32>
    %21 = arith.addf %20, %19 : vector<1x1xf32>
    %cst_14 = arith.constant dense<0.000000e+00> : vector<8x1xf32>
    %22 = tpu.matmul %0, %18, %cst_14 {dimension_numbers = #tpu.dot_dimension_numbers<[1], [0], [0], [1], [0, 0, 1, 1], [], []>} : vector<8x32xf32>, vector<32x1xf32>, vector<8x1xf32> -> vector<8x1xf32>
    %23 = vector.broadcast %21 : vector<1x1xf32> to vector<8x1xf32>
    %24 = arith.addf %22, %23 : vector<8x1xf32>
    %cst_15 = arith.constant dense<0xFF800000> : vector<1xf32>
    %25 = vector.multi_reduction <maximumf>, %24, %cst_15 [0] : vector<8x1xf32> to vector<1xf32>
    %26 = vector.shape_cast %25 : vector<1xf32> to vector<1x1xf32>
    %27 = vector.broadcast %26 : vector<1x1xf32> to vector<8x1xf32>
    %28 = arith.subf %24, %27 : vector<8x1xf32>
    %29 = math.exp %28 : vector<8x1xf32>
    %cst_16 = arith.constant dense<0.000000e+00> : vector<1xf32>
    %30 = vector.multi_reduction <add>, %29, %cst_16 [0] : vector<8x1xf32> to vector<1xf32>
    %31 = vector.shape_cast %30 : vector<1xf32> to vector<1x1xf32>
    %32 = tpu.reciprocal %31 {approx = true} : vector<1x1xf32> -> vector<1x1xf32>
    %33 = vector.broadcast %32 : vector<1x1xf32> to vector<8x1xf32>
    %34 = arith.mulf %29, %33 : vector<8x1xf32>
    %35 = vector.broadcast %34 : vector<8x1xf32> to vector<8x32xf32>
    %36 = arith.mulf %35, %0 : vector<8x32xf32>
    %cst_17 = arith.constant dense<0.000000e+00> : vector<32xf32>
    %37 = vector.multi_reduction <add>, %36, %cst_17 [0] : vector<8x32xf32> to vector<32xf32>
    %38 = vector.shape_cast %37 : vector<32xf32> to vector<1x32xf32>
    %c64 = arith.constant 64 : index
    %c0_18 = arith.constant 0 : index
    %39 = vector.load %arg1[%c64, %c0_18] : memref<296x128xf32, #tpu.memory_space<vmem>>, vector<32x64xf32>
    %c96 = arith.constant 96 : index
    %c0_19 = arith.constant 0 : index
    %40 = vector.load %arg1[%c96, %c0_19] : memref<296x128xf32, #tpu.memory_space<vmem>>, vector<32x64xf32>
    %c291 = arith.constant 291 : index
    %c0_20 = arith.constant 0 : index
    %41 = vector.load %arg1[%c291, %c0_20] : memref<296x128xf32, #tpu.memory_space<vmem>>, vector<1x64xf32>
    %cst_21 = arith.constant dense<0.000000e+00> : vector<1x64xf32>
    %42 = tpu.matmul %38, %40, %cst_21 {dimension_numbers = #tpu.dot_dimension_numbers<[1], [0], [0], [1], [0, 0, 1, 1], [], []>} : vector<1x32xf32>, vector<32x64xf32>, vector<1x64xf32> -> vector<1x64xf32>
    %43 = arith.addf %42, %41 : vector<1x64xf32>
    %c160 = arith.constant 160 : index
    %c0_22 = arith.constant 0 : index
    %44 = vector.load %arg1[%c160, %c0_22] : memref<296x128xf32, #tpu.memory_space<vmem>>, vector<32x96xf32>
    %cst_23 = arith.constant dense<0.000000e+00> : vector<1x96xf32>
    %45 = tpu.matmul %38, %44, %cst_23 {dimension_numbers = #tpu.dot_dimension_numbers<[1], [0], [0], [1], [0, 0, 1, 1], [], []>} : vector<1x32xf32>, vector<32x96xf32>, vector<1x96xf32> -> vector<1x96xf32>
    %46 = arith.addf %16, %45 : vector<1x96xf32>
    %47 = vector.extract_strided_slice %46 {offsets = [0, 0], sizes = [1, 32], strides = [1, 1]} : vector<1x96xf32> to vector<1x32xf32>
    %48 = vector.extract_strided_slice %12 {offsets = [0, 0], sizes = [1, 32], strides = [1, 1]} : vector<1x96xf32> to vector<1x32xf32>
    %49 = arith.addf %47, %48 : vector<1x32xf32>
    %50 = arith.negf %49 : vector<1x32xf32>
    %51 = math.exp %50 : vector<1x32xf32>
    %cst_24 = arith.constant 1.000000e+00 : f32
    %52 = vector.broadcast %cst_24 : f32 to vector<1x32xf32>
    %53 = arith.addf %52, %51 : vector<1x32xf32>
    %54 = arith.divf %52, %53 : vector<1x32xf32>
    %55 = vector.extract_strided_slice %46 {offsets = [0, 32], sizes = [1, 32], strides = [1, 1]} : vector<1x96xf32> to vector<1x32xf32>
    %56 = vector.extract_strided_slice %12 {offsets = [0, 32], sizes = [1, 32], strides = [1, 1]} : vector<1x96xf32> to vector<1x32xf32>
    %57 = arith.addf %55, %56 : vector<1x32xf32>
    %58 = arith.negf %57 : vector<1x32xf32>
    %59 = math.exp %58 : vector<1x32xf32>
    %cst_25 = arith.constant 1.000000e+00 : f32
    %60 = vector.broadcast %cst_25 : f32 to vector<1x32xf32>
    %61 = arith.addf %60, %59 : vector<1x32xf32>
    %62 = arith.divf %60, %61 : vector<1x32xf32>
    %63 = vector.extract_strided_slice %46 {offsets = [0, 64], sizes = [1, 32], strides = [1, 1]} : vector<1x96xf32> to vector<1x32xf32>
    %64 = vector.extract_strided_slice %12 {offsets = [0, 64], sizes = [1, 32], strides = [1, 1]} : vector<1x96xf32> to vector<1x32xf32>
    %65 = arith.mulf %54, %64 : vector<1x32xf32>
    %66 = arith.addf %63, %65 : vector<1x32xf32>
    %67 = math.tanh %66 : vector<1x32xf32>
    %cst_26 = arith.constant 1.000000e+00 : f32
    %68 = vector.broadcast %cst_26 : f32 to vector<1x32xf32>
    %69 = arith.subf %68, %62 : vector<1x32xf32>
    %70 = arith.mulf %69, %67 : vector<1x32xf32>
    %71 = arith.mulf %62, %1 : vector<1x32xf32>
    %72 = arith.addf %70, %71 : vector<1x32xf32>
    %cst_27 = arith.constant dense<0.000000e+00> : vector<1x64xf32>
    %73 = tpu.matmul %72, %39, %cst_27 {dimension_numbers = #tpu.dot_dimension_numbers<[1], [0], [0], [1], [0, 0, 1, 1], [], []>} : vector<1x32xf32>, vector<32x64xf32>, vector<1x64xf32> -> vector<1x64xf32>
    %74 = arith.addf %43, %73 : vector<1x64xf32>
    %cst_28 = arith.constant dense<0xFF800000> : vector<1xf32>
    %75 = vector.multi_reduction <maximumf>, %74, %cst_28 [1] : vector<1x64xf32> to vector<1xf32>
    %76 = vector.shape_cast %75 : vector<1xf32> to vector<1x1xf32>
    %77 = vector.broadcast %76 : vector<1x1xf32> to vector<1x64xf32>
    %78 = arith.subf %74, %77 : vector<1x64xf32>
    %79 = math.exp %78 : vector<1x64xf32>
    %cst_29 = arith.constant dense<0.000000e+00> : vector<1xf32>
    %80 = vector.multi_reduction <add>, %79, %cst_29 [1] : vector<1x64xf32> to vector<1xf32>
    %81 = vector.shape_cast %80 : vector<1xf32> to vector<1x1xf32>
    %82 = math.log %81 : vector<1x1xf32>
    %83 = arith.addf %76, %82 : vector<1x1xf32>
    %84 = vector.broadcast %83 : vector<1x1xf32> to vector<1x64xf32>
    %85 = arith.subf %74, %84 : vector<1x64xf32>
    %cst_30 = arith.constant 0.000000e+00 : f32
    %86 = vector.broadcast %cst_30 : f32 to vector<1x32xf32>
    %87 = tpu.concatenate %85, %72, %86 in 1 : vector<1x64xf32>, vector<1x32xf32>, vector<1x32xf32> -> vector<1x128xf32>
    %88 = tpu.iota {dimensions = array<i32: 1>} : vector<8x128xi32>
    %89 = tpu.iota {dimensions = array<i32: 0>} : vector<8x128xi32>
    %c0_i32_31 = arith.constant 0 : i32
    %90 = vector.broadcast %c0_i32_31 : i32 to vector<8x128xi32>
    %91 = arith.cmpi eq, %89, %90 : vector<8x128xi32>
    %92 = vector.shape_cast %87 : vector<1x128xf32> to vector<1x128xf32>
    %93 = vector.broadcast %92 : vector<1x128xf32> to vector<8x128xf32>
    %cst_32 = arith.constant 0.000000e+00 : f32
    %94 = vector.broadcast %cst_32 : f32 to vector<8x128xf32>
    %95 = arith.select %91, %93, %94 : vector<8x128xi1>, vector<8x128xf32>
    %c96_i32 = arith.constant 96 : i32
    %96 = vector.broadcast %c96_i32 : i32 to vector<8x128xi32>
    %97 = arith.cmpi eq, %88, %96 : vector<8x128xi32>
    %c8_i32 = arith.constant 8 : i32
    %98 = vector.broadcast %c8_i32 : i32 to vector<8x128xi32>
    %99 = arith.cmpi slt, %89, %98 : vector<8x128xi32>
    %100 = arith.andi %97, %99 : vector<8x128xi1>
    %101 = vector.shape_cast %34 : vector<8x1xf32> to vector<8x1xf32>
    %102 = vector.broadcast %101 : vector<8x1xf32> to vector<8x128xf32>
    %103 = arith.select %100, %102, %95 : vector<8x128xi1>, vector<8x128xf32>
    %c0_33 = arith.constant 0 : index
    %c0_34 = arith.constant 0 : index
    %104 = vector.load %arg3[%c0_33, %c0_34] : memref<8x128xf32, #tpu.memory_space<vmem>>, vector<8x128xf32>
    tpu.vector_store %arg3[%c0_33, %c0_34], %103 {strides = array<i32>} : memref<8x128xf32, #tpu.memory_space<vmem>>, vector<8x128xf32>,
    return
  }
}

</mosaic_0001>

<llo_original>
// kernel: bahdanau_decoder_step.1
$region0: #{bahdanau_decoder_step.1}
  #allocation0 [shape = 'u32[]', space=smem, size = 0x4, offset = 0x4, fixed_abs, tag = 'smem constant byte address 0x4 - core index']
  #allocation1 [shape = 'u32[72,128]{1,0:T(1,128)}', space=vmem, size = 0x9000, scoped, tag = 'internal scratch']
  #allocation2 [shape = 's32[1]{0:T(128)S(6)}', space=smem, size = 0x200, scoped, tag = 'scoped memory for bahdanau_decoder_step.1']
  %s0 = inlined_call_operand.<no memory space> [shape: s32[1], index: 0, kind: input, shape index: {}]
  %s1 = inlined_call_operand.hbm [shape: f32[296,128], index: 1, kind: input, shape index: {}]
  %s2 = inlined_call_operand.vmem [shape: f32[16,128], index: 2, kind: input, shape index: {}]
  %s3 = inlined_call_operand.vmem [shape: f32[8,128], index: 3, kind: output, shape index: {}]
  %s4 = sld [smem:[#allocation0]]
  $region26: #{bahdanau_decoder_step.1} parent=0
    _
  %s6 = ssub.s32 1, %s4
  %s7 = scalar_select 0, %s6, %s4
  %8 = sst [smem:[#allocation2]] %s0
  $region1: #{bahdanau_decoder_step.1} parent=0
    #allocation3 [shape = 'u8[151552]{0}', space=vmem, size = 0x25000, scoped, tag = 'input window, operand 1, single buffered']
    #allocation4 [shape = 's32[1]{0}', space=sflag, size = 0x4, scoped, tag = 'scoped memory for bahdanau_decoder_step.1']
    %9 = vsyncpa [#allocation4], 0
    // Predicated region
    $region2: #{bahdanau_decoder_step.1} parent=1 // pred_check
      _
    $region3: #{bahdanau_decoder_step.1} parent=1 // pred_check_branch
      %11 = sbr.rel (0) target = $region5
    $region4: #{bahdanau_decoder_step.1} parent=1 // pred_region
      _
    $region5: #{bahdanau_decoder_step.1} parent=1 // pred_fallthru
      _
    // Predicated region
    $region6: #{bahdanau_decoder_step.1} parent=1 // pred_check
      _
    $region7: #{bahdanau_decoder_step.1} parent=1 // pred_check_branch
      %13 = sbr.rel (0) target = $region9
    $region8: #{bahdanau_decoder_step.1} parent=1 // pred_region
      %15 = vsyncadd [#allocation4], 0
      %s16 = sshll.u32 %s1, 4
      %s17 = int_to_ptr.hbm [resolvable:$true] %s16
      %s18 = sshll.u32 [#allocation3], 4
      %s19 = int_to_ptr.vmem [resolvable:$true] %s18
      %24 = dma.hbm_to_vmem [thread:$0]  %s17, 4736, %s19, [#allocation4], 128, 128, 8
    $region9: #{bahdanau_decoder_step.1} parent=1 // pred_fallthru
      _
    // Predicated region
    $region10: #{bahdanau_decoder_step.1} parent=1 // pred_check
      _
    $region11: #{bahdanau_decoder_step.1} parent=1 // pred_check_branch
      %26 = sbr.rel (0) target = $region13
    $region12: #{bahdanau_decoder_step.1} parent=1 // pred_region
      _
    $region13: #{bahdanau_decoder_step.1} parent=1 // pred_fallthru
      _
    // Predicated region
    $region14: #{bahdanau_decoder_step.1} parent=1 // pred_check
      _
    $region15: #{bahdanau_decoder_step.1} parent=1 // pred_check_branch
      %28 = sbr.rel (0) target = $region17
    $region16: #{bahdanau_decoder_step.1} parent=1 // pred_region
      %30 = dma.done [#allocation4], 4736
    $region17: #{bahdanau_decoder_step.1} parent=1 // pred_fallthru
      _
    %v31 = vld [vmem:[%s2] sm:$0xff]
    %v32 = vld [vmem:[%s2 + $0x8] sm:$0x1]
    %s33 = sld [smem:[#allocation2]]
    %p34 = scmp.gt.s32.totalorder %s33, 0
    %s35 = scalar_select %p34, %s33, 0
    %p36 = scmp.lt.s32.totalorder %s35, 63
    %s37 = scalar_select %p36, %s35, 63
    %s38 = scalar_lea.vmem [#allocation3], %s37
    %v39 = vld [vmem:[%s38] sm:$0x1]
    %v40 = vld [vmem:[#allocation3 + $0xc0] sm:$0xff]
    %v41 = vld [vmem:[#allocation3 + $0xc8] sm:$0xff]
    %v42 = vld [vmem:[#allocation3 + $0xd0] sm:$0xff]
    %v43 = vld [vmem:[#allocation3 + $0xd8] sm:$0xff]
    %v44 = vld [vmem:[#allocation3 + $0x122] sm:$0x1]
    %vm45 = vcmask 261120
    %v47 = vsel %vm45, %v32, 0
    %49 = vmatpush.msra.mxu0 0.0
    %50 = vmatpush.msra.mxu0 0.0
    %51 = vmatpush.msra.mxu0 0.0
    %52 = vmatpush.msra.mxu0 0.0
    %53 = vmatpush.msra.mxu0 0.0
    %54 = vmatpush.msra.mxu0 0.0
    %55 = vmatpush.msra.mxu0 0.0
    %56 = vmatpush.msra.mxu0 0.0
    %57 = vmatpush.msra.mxu0 0.0
    %58 = vmatpush.msra.mxu0 0.0
    %59 = vmatpush.msra.mxu0 0.0
    %60 = vmatpush.msra.mxu0 0.0
    %61 = vmatpush.msra.mxu0 %v43
    %62 = vmatpush.msra.mxu0 %v42
    %63 = vmatpush.msra.mxu0 %v41
    %64 = vmatpush.msra.mxu0 %v40
    %65 = vmatmul.f32.gmra.mxu0 %v47
    %v66 = vpop.f32.mrf.mxu0
    %v67 = vadd.f32 %v44, %v66
    %68 = vdwg.mxu0
    %v69 = vld [vmem:[#allocation3 + $0x121] sm:$0x1]
    %v70 = vld [vmem:[#allocation3 + $0x80] sm:$0xff]
    %v71 = vld [vmem:[#allocation3 + $0x88] sm:$0xff]
    %v72 = vld [vmem:[#allocation3 + $0x90] sm:$0xff]
    %v73 = vld [vmem:[#allocation3 + $0x98] sm:$0xff]
    %v75 = vsel %vm45, %v39, 0
    %77 = vmatpush.msra.mxu0 0.0
    %78 = vmatpush.msra.mxu0 0.0
    %79 = vmatpush.msra.mxu0 0.0
    %80 = vmatpush.msra.mxu0 0.0
    %81 = vmatpush.msra.mxu0 0.0
    %82 = vmatpush.msra.mxu0 0.0
    %83 = vmatpush.msra.mxu0 0.0
    %84 = vmatpush.msra.mxu0 0.0
    %85 = vmatpush.msra.mxu0 0.0
    %86 = vmatpush.msra.mxu0 0.0
    %87 = vmatpush.msra.mxu0 0.0
    %88 = vmatpush.msra.mxu0 0.0
    %89 = vmatpush.msra.mxu0 %v73
    %90 = vmatpush.msra.mxu0 %v72
    %91 = vmatpush.msra.mxu0 %v71
    %92 = vmatpush.msra.mxu0 %v70
    %93 = vmatmul.f32.gmra.mxu0 %v75
    %v94 = vpop.f32.mrf.mxu0
    %v95 = vadd.f32 %v69, %v94
    %96 = vdwg.mxu0
    %v97 = vld [vmem:[#allocation3 + $0xe0] sm:$0xff]
    %v98 = vld [vmem:[#allocation3 + $0xe8] sm:$0xff]
    %v99 = vld [vmem:[#allocation3 + $0xf0] sm:$0xff]
    %v100 = vld [vmem:[#allocation3 + $0xf8] sm:$0xff]
    %v101 = vld [vmem:[#allocation3 + $0x100] sm:$0xff]
    %v102 = vld [vmem:[#allocation3 + $0x108] sm:$0xff]
    %v103 = vld [vmem:[#allocation3 + $0x110] sm:$0xff]
    %v104 = vld [vmem:[#allocation3 + $0x118] sm:$0xff]
    %v105 = vld [vmem:[#allocation3 + $0x120] sm:$0x1]
    %106 = vmatpush.msra.mxu0 0.0
    %107 = vmatpush.msra.mxu0 0.0
    %108 = vmatpush.msra.mxu0 0.0
    %109 = vmatpush.msra.mxu0 0.0
    %110 = vmatpush.msra.mxu0 0.0
    %111 = vmatpush.msra.mxu0 0.0
    %112 = vmatpush.msra.mxu0 0.0
    %113 = vmatpush.msra.mxu0 0.0
    %114 = vmatpush.msra.mxu0 0.0
    %115 = vmatpush.msra.mxu0 0.0
    %116 = vmatpush.msra.mxu0 0.0
    %117 = vmatpush.msra.mxu0 0.0
    %118 = vmatpush.msra.mxu0 %v100
    %119 = vmatpush.msra.mxu0 %v99
    %120 = vmatpush.msra.mxu0 %v98
    %121 = vmatpush.msra.mxu0 %v97
    %122 = vmatmul.f32.gmra.mxu0 %v47
    %v123 = vpop.f32.mrf.mxu0
    %v124 = vadd.f32 %v105, %v123
    %125 = vdwg.mxu0
    %v126 = vperm.slane %v124, 0
    %v128 = vsel %vm45, %v31, 0
    %130 = vmatpush.msra.mxu0 0.0
    %131 = vmatpush.msra.mxu0 0.0
    %132 = vmatpush.msra.mxu0 0.0
    %133 = vmatpush.msra.mxu0 0.0
    %134 = vmatpush.msra.mxu0 0.0
    %135 = vmatpush.msra.mxu0 0.0
    %136 = vmatpush.msra.mxu0 0.0
    %137 = vmatpush.msra.mxu0 0.0
    %138 = vmatpush.msra.mxu0 0.0
    %139 = vmatpush.msra.mxu0 0.0
    %140 = vmatpush.msra.mxu0 0.0
    %141 = vmatpush.msra.mxu0 0.0
    %142 = vmatpush.msra.mxu0 %v104
    %143 = vmatpush.msra.mxu0 %v103
    %144 = vmatpush.msra.mxu0 %v102
    %145 = vmatpush.msra.mxu0 %v101
    %146 = vmatmul.f32.gmra.mxu0 %v128
    %v147 = vpop.f32.mrf.mxu0
    %v148 = vadd.f32 %v126, %v147
    %149 = vdwg.mxu0
    %vm150 = vcmask 7168
    %v151 = vsel %vm150, %v148, -inf
    %v152 = vrot.slane %v151, 4
    %v153 = vmax.f32 %v151, %v152
    %v154 = vrot.slane %v153, 2
    %v155 = vmax.f32 %v153, %v154
    %v156 = vrot.slane %v155, 1
    %v157 = vmax.f32 %v155, %v156
    %v158 = vsub.f32 %v148, %v157
    %v159 = vmul.f32 %v158, 1.442695
    %v160 = vpow.pop %v159
    %v161 = vsel %vm150, %v160, 0.0
    %v162 = vrot.slane %v161, 4
    %v163 = vadd.f32 %v161, %v162
    %v164 = vrot.slane %v163, 2
    %v165 = vadd.f32 %v163, %v164
    %v166 = vrot.slane %v165, 1
    %v167 = vadd.f32 %v165, %v166
    %v168 = vrcp.pop %v167
    %v169 = vmul.f32 %v160, %v168
    %171 = vset.pattern.permute.xlu0 0
    %172 = vperm.xlu0 %171, %v169
    %v173 = vpop.permute.xlu0 %172
    %v175 = vmul.f32 %v173, %v31
    %v176 = vsel %vm45, %v175, 0.0
    %v177 = vrot.slane %v176, 4
    %v178 = vadd.f32 %v176, %v177
    %v179 = vrot.slane %v178, 2
    %v180 = vadd.f32 %v178, %v179
    %v181 = vrot.slane %v180, 1
    %v182 = vadd.f32 %v180, %v181
    %v183 = vld [vmem:[#allocation3 + $0x40] sm:$0xff]
    %v184 = vld [vmem:[#allocation3 + $0x48] sm:$0xff]
    %v185 = vld [vmem:[#allocation3 + $0x50] sm:$0xff]
    %v186 = vld [vmem:[#allocation3 + $0x58] sm:$0xff]
    %v187 = vld [vmem:[#allocation3 + $0x60] sm:$0xff]
    %v188 = vld [vmem:[#allocation3 + $0x68] sm:$0xff]
    %v189 = vld [vmem:[#allocation3 + $0x70] sm:$0xff]
    %v190 = vld [vmem:[#allocation3 + $0x78] sm:$0xff]
    %v191 = vld [vmem:[#allocation3 + $0x123] sm:$0x1]
    %v193 = vsel %vm45, %v182, 0
    %195 = vmatpush.msra.mxu0 0.0
    %196 = vmatpush.msra.mxu0 0.0
    %197 = vmatpush.msra.mxu0 0.0
    %198 = vmatpush.msra.mxu0 0.0
    %199 = vmatpush.msra.mxu0 0.0
    %200 = vmatpush.msra.mxu0 0.0
    %201 = vmatpush.msra.mxu0 0.0
    %202 = vmatpush.msra.mxu0 0.0
    %203 = vmatpush.msra.mxu0 0.0
    %204 = vmatpush.msra.mxu0 0.0
    %205 = vmatpush.msra.mxu0 0.0
    %206 = vmatpush.msra.mxu0 0.0
    %207 = vmatpush.msra.mxu0 %v190
    %208 = vmatpush.msra.mxu0 %v189
    %209 = vmatpush.msra.mxu0 %v188
    %210 = vmatpush.msra.mxu0 %v187
    %211 = vmatmul.f32.gmra.mxu0 %v193
    %v212 = vpop.f32.mrf.mxu0
    %v213 = vadd.f32 %v191, %v212
    %214 = vdwg.mxu0
    %v215 = vld [vmem:[#allocation3 + $0xa0] sm:$0xff]
    %v216 = vld [vmem:[#allocation3 + $0xa8] sm:$0xff]
    %v217 = vld [vmem:[#allocation3 + $0xb0] sm:$0xff]
    %v218 = vld [vmem:[#allocation3 + $0xb8] sm:$0xff]
    %219 = vmatpush.msra.mxu0 0.0
    %220 = vmatpush.msra.mxu0 0.0
    %221 = vmatpush.msra.mxu0 0.0
    %222 = vmatpush.msra.mxu0 0.0
    %223 = vmatpush.msra.mxu0 0.0
    %224 = vmatpush.msra.mxu0 0.0
    %225 = vmatpush.msra.mxu0 0.0
    %226 = vmatpush.msra.mxu0 0.0
    %227 = vmatpush.msra.mxu0 0.0
    %228 = vmatpush.msra.mxu0 0.0
    %229 = vmatpush.msra.mxu0 0.0
    %230 = vmatpush.msra.mxu0 0.0
    %231 = vmatpush.msra.mxu0 %v218
    %232 = vmatpush.msra.mxu0 %v217
    %233 = vmatpush.msra.mxu0 %v216
    %234 = vmatpush.msra.mxu0 %v215
    %235 = vmatmul.f32.gmra.mxu0 %v193
    %v236 = vpop.f32.mrf.mxu0
    %v237 = vadd.f32 0.0, %v236
    %238 = vdwg.mxu0
    %v239 = vadd.f32 %v95, %v237
    %v240 = vadd.f32 %v239, %v67
    %v241 = vxor.u32 %v240, 2147483648
    %v242 = vmul.f32 %v241, 1.442695
    %v243 = vpow.pop %v242
    %v244 = vadd.f32 %v243, 1.0
    %v245 = vrcp.pop %v244
    %v246 = vmul.f32 %v244, %v245
    %v247 = vsub.f32 1.0, %v246
    %v248 = vmul.f32 %v245, %v247
    %v249 = vadd.f32 %v245, %v248
    %vm250 = vweird.f32 %v244
    %vm251 = vweird.f32 %v245
    %vm252 = vmor %vm250, %vm251
    %v253 = vsel %vm252, %v245, %v249
    %v254 = vand.u32 2147483647, %v244
    %vm255 = vcmp.eq.f32.partialorder %v254, 8.507059e+37
    %v256 = vand.u32 %v244, 2147483648
    %v257 = vor.u32 1.1754944e-38, %v256
    %v258 = vsel %vm255, %v257, %v253
    %v259 = vmul.f32 1.0, %v258
    %261 = vrot.lane.b32.xlu0 %v67, 64
    %v262 = vpop.permute.xlu0 %261
    %v264 = vmul.f32 %v259, %v262
    %266 = vrot.lane.b32.xlu0 %v264, 64
    %v267 = vpop.permute.xlu0 %266
    %v269 = vadd.f32 %v239, %v267
    %v270 = vtanh.pop %v269
    %v271 = vsub.f32 1.0, %v259
    %273 = vrot.lane.b32.xlu0 %v270, 96
    %v274 = vpop.permute.xlu0 %273
    %v276 = vmul.f32 %v271, %v274
    %277 = vrot.lane.b32.xlu0 %v32, 32
    %v278 = vpop.permute.xlu0 %277
    %v280 = vmul.f32 %v259, %v278
    %v281 = vadd.f32 %v276, %v280
    %283 = vrot.lane.b32.xlu0 %v281, 96
    %v284 = vpop.permute.xlu0 %283
    %v285 = vsel %vm45, %v284, 0
    %287 = vmatpush.msra.mxu0 0.0
    %288 = vmatpush.msra.mxu0 0.0
    %289 = vmatpush.msra.mxu0 0.0
    %290 = vmatpush.msra.mxu0 0.0
    %291 = vmatpush.msra.mxu0 0.0
    %292 = vmatpush.msra.mxu0 0.0
    %293 = vmatpush.msra.mxu0 0.0
    %294 = vmatpush.msra.mxu0 0.0
    %295 = vmatpush.msra.mxu0 0.0
    %296 = vmatpush.msra.mxu0 0.0
    %297 = vmatpush.msra.mxu0 0.0
    %298 = vmatpush.msra.mxu0 0.0
    %299 = vmatpush.msra.mxu0 %v186
    %300 = vmatpush.msra.mxu0 %v185
    %301 = vmatpush.msra.mxu0 %v184
    %302 = vmatpush.msra.mxu0 %v183
    %303 = vmatmul.f32.gmra.mxu0 %v285
    %v304 = vpop.f32.mrf.mxu0
    %v305 = vadd.f32 0.0, %v304
    %306 = vdwg.mxu0
    %v307 = vadd.f32 %v213, %v305
    %vm308 = vcmask 516096
    %v309 = vsel %vm308, %v307, -inf
    %310 = vmax.xlane.f32.xlu0 %v309
    %v311 = vpop.xlane.xlu0 %310
    %v312 = vsub.f32 %v307, %v311
    %v313 = vmul.f32 %v312, 1.442695
    %v314 = vpow.pop %v313
    %v315 = vsel %vm308, %v314, 0.0
    %316 = vadd.xlane.f32.xlu0 %v315
    %v317 = vpop.xlane.xlu0 %316
    %v318 = vlog2.pop %v317
    %v319 = vmul.f32 %v318, 0.6931472
    %v320 = vadd.f32 %v311, %v319
    %v321 = vsub.f32 %v307, %v320
    %322 = vrot.lane.b32.xlu0 %v281, 32
    %v323 = vpop.permute.xlu0 %322
    %vm325 = vcmask 523264
    %v326 = vsel %vm325, %v321, %v323
    %vm327 = vcmask 785408
    %v328 = vsel %vm327, %v326, 0.0
    %v329 = vlaneseq
    %v330 = vand.u32 %v329, 127
    %v331 = vlaneseq
    %v332 = vshrl.u32 %v331, 7
    %vm333 = vcmp.eq.s32.totalorder %v332, 0
    %v334 = vperm.slane %v328, 0
    %v335 = vsel %vm333, %v334, 0.0
    %vm336 = vcmp.eq.s32.totalorder %v330, 96
    %vm337 = vcmp.lt.s32.totalorder %v332, 8
    %vm338 = vmand %vm336, %vm337
    %v339 = vsel %vm338, %v173, %v335
    %340 = vst [vmem:[%s3] sm:$0xff] %v339
    // Predicated region
    $region18: #{bahdanau_decoder_step.1} parent=1 // pred_check
      _
    $region19: #{bahdanau_decoder_step.1} parent=1 // pred_check_branch
      %342 = sbr.rel (0) target = $region21
    $region20: #{bahdanau_decoder_step.1} parent=1 // pred_region
      _
    $region21: #{bahdanau_decoder_step.1} parent=1 // pred_fallthru
      _
    // Predicated region
    $region22: #{bahdanau_decoder_step.1} parent=1 // pred_check
      _
    $region23: #{bahdanau_decoder_step.1} parent=1 // pred_check_branch
      %344 = sbr.rel (0) target = $region25
    $region24: #{bahdanau_decoder_step.1} parent=1 // pred_region
      _
    $region25: #{bahdanau_decoder_step.1} parent=1 // pred_fallthru
      _
    %345 = vsyncpa [#allocation4], 1

</llo_original>
